<compile_context>
chip_gen: v5e
topology: v5e:2x2
jax: 0.10.0
libtpu: 0.0.40
codegen_flags: <defaults>
</compile_context>

<pallas_src>
import functools

import jax
import jax.numpy as jnp
from jax.experimental import pallas as pl
from jax.experimental.pallas import tpu as pltpu

_LANE = 128
_MIN_COLS = 2048         # don't fold the column axis below this (long DMA blocks)
_MAX_ROWS = 8192         # cap on folded row count (bounds scratch/output size)
_ROW_TILE_CAP = 512
_MAX_COL_TILE = 8192     # caps the unrolled lane-fold length
_BLOCK_BYTES = 10 << 20  # per-step input-block byte budget (x2 double buffering)


def _divisors(n):
    small, large = [], []
    d = 1
    while d * d <= n:
        if n % d == 0:
            small.append(d)
            if d != n // d:
                large.append(n // d)
        d += 1
    return small + large[::-1]


def _choose_fold(nc, hw):
    """Largest r | hw with hw//r >= _MIN_COLS (or hw itself for small images)
    and nc*r <= _MAX_ROWS.  Folding HW into the row axis gives >= 2 row tiles
    (megacore on v7x) and lets the row tile divide the row count exactly, so
    no padding and no row masking are ever needed."""
    best = 1
    min_cols = min(hw, _MIN_COLS)
    for r in _divisors(hw):
        if hw // r >= min_cols and nc * r <= _MAX_ROWS and r > best:
            best = r
    return best


def _choose_row_tile(rows):
    """Largest divisor of rows that is a multiple of 32 (sublane-safe for
    int8/bf16 input blocks), <= _ROW_TILE_CAP, and leaves >= 2 row tiles when
    rows allows; falls back to one full-height block for small row counts."""
    limit = min(_ROW_TILE_CAP, rows // 2 if rows >= 64 else rows)
    for t in range(limit, 31, -1):
        if t % 32 == 0 and rows % t == 0:
            return t
    return rows  # full-dim block (always legal)


def _choose_col_tile(cols, tm, bytes_per_pair):
    """Column tile: a multiple of 128, sized so double-buffered input blocks
    stay within the VMEM budget; prefer an exact divisor of cols (no ragged
    tile), otherwise the ragged last tile is masked in-kernel."""
    if cols < _LANE:
        return cols                      # tiny image: one narrow tile
    max_elems = max(_LANE, _BLOCK_BYTES // (tm * bytes_per_pair))
    cap = min(cols, max_elems, _MAX_COL_TILE)
    cap -= cap % _LANE
    for t in range(cap, _LANE - 1, -_LANE):
        if cols % t == 0:
            return t
    return cap


def _f1_sums_kernel(pred_ref, true_ref, tp_ref, sp_ref, st_ref,
                    tp_acc, sp_acc, st_acc, *, cols, tn):
    k = pl.program_id(1)
    nk = pl.num_programs(1)

    @pl.when(k == 0)
    def _init():
        tp_acc[...] = jnp.zeros_like(tp_acc)
        sp_acc[...] = jnp.zeros_like(sp_acc)
        st_acc[...] = jnp.zeros_like(st_acc)

    # round(sigmoid(x)) == (x > 0) (incl. x == 0 under round-half-to-even):
    # one VPU compare instead of EUP exp + reciprocal + round.
    mask = pred_ref[...] > 0
    yt = true_ref[...].astype(jnp.float32)

    rem = cols % tn  # static
    if rem:
        # Ragged last column tile: data past `cols` in the boundary block is
        # unspecified -> mask it out.  (Static branch: zero cost when tn | cols.)
        bound = jnp.where(k == nk - 1, rem, tn)
        lane = jax.lax.broadcasted_iota(jnp.int32, mask.shape, 1)
        valid = lane < bound
        mask = jnp.logical_and(mask, valid)
        yt = jnp.where(valid, yt, 0.0)

    yp = mask.astype(jnp.float32)        # sum_pred term
    tp_e = jnp.where(mask, yt, 0.0)      # tp term (no extra multiply)

    if tn % _LANE == 0:
        # Deferred cross-lane reduce: fold lane-aligned 128-wide chunks with
        # pure VPU adds (identical vreg lane layout -> no relayout, no XLU);
        # the single cross-lane reduce happens once per row tile at finalize.
        def lane_fold(x):
            acc = x[:, :_LANE]
            for j in range(1, tn // _LANE):
                acc = acc + x[:, j * _LANE:(j + 1) * _LANE]
            return acc
        tp_acc[...] += lane_fold(tp_e)
        sp_acc[...] += lane_fold(yp)
        st_acc[...] += lane_fold(yt)
    else:
        # Tiny-image fallback (single narrow column tile, tn == cols < 128).
        tp_acc[:, :1] += jnp.sum(tp_e, axis=-1, keepdims=True)
        sp_acc[:, :1] += jnp.sum(yp, axis=-1, keepdims=True)
        st_acc[:, :1] += jnp.sum(yt, axis=-1, keepdims=True)

    @pl.when(k == nk - 1)
    def _finalize():
        # One XLU lane reduce per row tile; F1 math lives in the JAX epilogue.
        tp_ref[...] = jnp.sum(tp_acc[...], axis=-1, keepdims=True)
        sp_ref[...] = jnp.sum(sp_acc[...], axis=-1, keepdims=True)
        st_ref[...] = jnp.sum(st_acc[...], axis=-1, keepdims=True)


def f1_score(y_pred, y_true, beta=1.0, eps=1e-07):
    """Pallas TPU implementation of F1Score.forward.

    y_pred: (N, C, H, W) logits (f32 or bf16 -- pass bf16 as-is, it halves the
    dominant HBM stream).  y_true: (N, C, H, W) binary mask (f32 / bf16 /
    int8 / bool; cast in-kernel).  Returns a scalar float32.
    """
    n, c, h, w = y_pred.shape
    nc, hw = n * c, h * w

    bytes_per_pair = (jnp.dtype(y_pred.dtype).itemsize
                      + jnp.dtype(y_true.dtype).itemsize)
    r = _choose_fold(nc, hw)
    rows, cols = nc * r, hw // r
    tm = _choose_row_tile(rows)
    tn = _choose_col_tile(cols, tm, bytes_per_pair)
    grid = (rows // tm, pl.cdiv(cols, tn))

    # Free (contiguous) reshape -- no pad, no extra HBM pass.
    pred2d = y_pred.reshape(rows, cols)
    true2d = y_true.reshape(rows, cols)

    kernel = functools.partial(_f1_sums_kernel, cols=cols, tn=tn)
    out_shape = jax.ShapeDtypeStruct((rows, 1), jnp.float32)
    out_spec = pl.BlockSpec((tm, 1), lambda i, k: (i, 0))
    bytes_accessed = (pred2d.size * pred2d.dtype.itemsize
                      + true2d.size * true2d.dtype.itemsize
                      + 3 * rows * 4)

    tp_rows, sp_rows, st_rows = pl.pallas_call(
        kernel,
        out_shape=(out_shape, out_shape, out_shape),
        grid_spec=pltpu.PrefetchScalarGridSpec(
            num_scalar_prefetch=0,
            grid=grid,
            in_specs=[
                pl.BlockSpec((tm, tn), lambda i, k: (i, k)),
                pl.BlockSpec((tm, tn), lambda i, k: (i, k)),
            ],
            out_specs=[out_spec, out_spec, out_spec],
            scratch_shapes=[pltpu.VMEM((tm, _LANE), jnp.float32)] * 3,
        ),
        compiler_params=pltpu.CompilerParams(
            dimension_semantics=("parallel", "arbitrary"),
            vmem_limit_bytes=32 * 1024 * 1024,
        ),
        cost_estimate=pl.CostEstimate(
            flops=6 * rows * cols,
            transcendentals=0,
            bytes_accessed=int(bytes_accessed),
        ),
    )(pred2d, true2d)

    # O(N*C) epilogue: undo the HW fold, then precision / recall / F1 / mean.
    # (f32 sums are exact up to 2^24 elements per (n, c) row.)
    def collapse(x):
        return x.reshape(nc, r).sum(axis=-1)

    tp = collapse(tp_rows)
    fp = collapse(sp_rows) - tp     # sum_pred - tp
    fn = collapse(st_rows) - tp     # sum_true - tp
    precision = tp / (tp + fp + eps)
    recall = tp / (tp + fn + eps)
    b2 = float(beta) * float(beta)
    f1 = (1.0 + b2) * precision * recall / (b2 * precision + recall + eps)
    return jnp.mean(f1)


if __name__ == "__main__":
    key = jax.random.PRNGKey(0)
    k1, k2 = jax.random.split(key)

    N, C, H, W = 2, 4, 16, 16
    # y_pred: raw f32 logits; y_true: binary mask stored as int8 in HBM
    # (the kernel casts internally; narrow mask dtype shrinks HBM traffic).
    y_pred = jax.random.normal(k1, (N, C, H, W), dtype=jnp.float32)
    y_true = (jax.random.uniform(k2, (N, C, H, W)) > 0.5).astype(jnp.int8)

    result = jax.block_until_ready(f1_score(y_pred, y_true))

    # Pure-JAX reference matching the PyTorch forward exactly.
    yt = y_true.astype(jnp.float32)
    yp = jnp.round(jax.nn.sigmoid(y_pred))
    tp = jnp.sum(yt * yp, axis=(2, 3))
    fp = jnp.sum((1.0 - yt) * yp, axis=(2, 3))
    fn = jnp.sum(yt * (1.0 - yp), axis=(2, 3))
    eps = 1e-07
    precision = tp / (tp + fp + eps)
    recall = tp / (tp + fn + eps)
    ref = jnp.mean(2.0 * precision * recall / (precision + recall + eps))

    assert jnp.allclose(result, ref, atol=1e-5, rtol=1e-5), (result, ref)
    print("KERNEL_OK")
</pallas_src>

<mosaic_0001>
module attributes {stable_mosaic.version = 11 : i64} {
  func.func @_f1_sums_kernel(%arg0: i32, %arg1: i32, %arg2: memref<8x256xf32, #tpu.memory_space<vmem>>, %arg3: memref<8x256xi8, #tpu.memory_space<vmem>>, %arg4: memref<8x1xf32, #tpu.memory_space<vmem>>, %arg5: memref<8x1xf32, #tpu.memory_space<vmem>>, %arg6: memref<8x1xf32, #tpu.memory_space<vmem>>, %arg7: memref<8x128xf32, #tpu.memory_space<vmem>>, %arg8: memref<8x128xf32, #tpu.memory_space<vmem>>, %arg9: memref<8x128xf32, #tpu.memory_space<vmem>>) attributes {dimension_semantics = [#tpu.dimension_semantics<parallel>, #tpu.dimension_semantics<arbitrary>], iteration_bounds = array<i64: 1, 1>, scalar_prefetch = 0 : i64, scratch_operands = 3 : i64, tpu.core_type = #tpu.core_type<tc>, window_params = [{transform_indices = @transform_0, window_bounds = array<i64: 8, 256>}, {transform_indices = @transform_1, window_bounds = array<i64: 8, 256>}, {transform_indices = @transform_2, window_bounds = array<i64: 8, 1>}, {transform_indices = @transform_3, window_bounds = array<i64: 8, 1>}, {transform_indices = @transform_4, window_bounds = array<i64: 8, 1>}]} {
    %c0_i32 = arith.constant 0 : i32
    %0 = arith.cmpi eq, %arg1, %c0_i32 : i32
    %1 = arith.extui %0 : i1 to i32
    %c0_i32_0 = arith.constant 0 : i32
    %2 = arith.cmpi ne, %1, %c0_i32_0 : i32
    scf.if %2 {
      %cst_19 = arith.constant 0.000000e+00 : f32
      %33 = vector.broadcast %cst_19 : f32 to vector<8x128xf32>
      %c0_20 = arith.constant 0 : index
      %c0_21 = arith.constant 0 : index
      %34 = vector.load %arg7[%c0_20, %c0_21] : memref<8x128xf32, #tpu.memory_space<vmem>>, vector<8x128xf32>
      tpu.vector_store %arg7[%c0_20, %c0_21], %33 {strides = array<i32>} : memref<8x128xf32, #tpu.memory_space<vmem>>, vector<8x128xf32>,
      %cst_22 = arith.constant 0.000000e+00 : f32
      %35 = vector.broadcast %cst_22 : f32 to vector<8x128xf32>
      %c0_23 = arith.constant 0 : index
      %c0_24 = arith.constant 0 : index
      %36 = vector.load %arg8[%c0_23, %c0_24] : memref<8x128xf32, #tpu.memory_space<vmem>>, vector<8x128xf32>
      tpu.vector_store %arg8[%c0_23, %c0_24], %35 {strides = array<i32>} : memref<8x128xf32, #tpu.memory_space<vmem>>, vector<8x128xf32>,
      %cst_25 = arith.constant 0.000000e+00 : f32
      %37 = vector.broadcast %cst_25 : f32 to vector<8x128xf32>
      %c0_26 = arith.constant 0 : index
      %c0_27 = arith.constant 0 : index
      %38 = vector.load %arg9[%c0_26, %c0_27] : memref<8x128xf32, #tpu.memory_space<vmem>>, vector<8x128xf32>
      tpu.vector_store %arg9[%c0_26, %c0_27], %37 {strides = array<i32>} : memref<8x128xf32, #tpu.memory_space<vmem>>, vector<8x128xf32>,
    } else {
    }
    %c0 = arith.constant 0 : index
    %c0_1 = arith.constant 0 : index
    %3 = vector.load %arg2[%c0, %c0_1] : memref<8x256xf32, #tpu.memory_space<vmem>>, vector<8x256xf32>
    %cst = arith.constant 0.000000e+00 : f32
    %4 = vector.broadcast %cst : f32 to vector<8x256xf32>
    %5 = arith.cmpf ogt, %3, %4 : vector<8x256xf32>
    %c0_2 = arith.constant 0 : index
    %c0_3 = arith.constant 0 : index
    %6 = vector.load %arg3[%c0_2, %c0_3] : memref<8x256xi8, #tpu.memory_space<vmem>>, vector<8x256xi8>
    %7 = arith.sitofp %6 : vector<8x256xi8> to vector<8x256xf32>
    %8 = arith.extui %5 : vector<8x256xi1> to vector<8x256xi32>
    %9 = arith.sitofp %8 : vector<8x256xi32> to vector<8x256xf32>
    %cst_4 = arith.constant 0.000000e+00 : f32
    %10 = vector.broadcast %cst_4 : f32 to vector<8x256xf32>
    %11 = arith.select %5, %7, %10 : vector<8x256xi1>, vector<8x256xf32>
    %c0_5 = arith.constant 0 : index
    %c0_6 = arith.constant 0 : index
    %12 = vector.load %arg7[%c0_5, %c0_6] : memref<8x128xf32, #tpu.memory_space<vmem>>, vector<8x128xf32>
    %13 = vector.extract_strided_slice %11 {offsets = [0, 0], sizes = [8, 128], strides = [1, 1]} : vector<8x256xf32> to vector<8x128xf32>
    %14 = vector.extract_strided_slice %11 {offsets = [0, 128], sizes = [8, 128], strides = [1, 1]} : vector<8x256xf32> to vector<8x128xf32>
    %15 = arith.addf %13, %14 : vector<8x128xf32>
    %16 = arith.addf %12, %15 : vector<8x128xf32>
    %c0_7 = arith.constant 0 : index
    %c0_8 = arith.constant 0 : index
    %17 = vector.load %arg7[%c0_7, %c0_8] : memref<8x128xf32, #tpu.memory_space<vmem>>, vector<8x128xf32>
    tpu.vector_store %arg7[%c0_7, %c0_8], %16 {strides = array<i32>} : memref<8x128xf32, #tpu.memory_space<vmem>>, vector<8x128xf32>,
    %c0_9 = arith.constant 0 : index
    %c0_10 = arith.constant 0 : index
    %18 = vector.load %arg8[%c0_9, %c0_10] : memref<8x128xf32, #tpu.memory_space<vmem>>, vector<8x128xf32>
    %19 = vector.extract_strided_slice %9 {offsets = [0, 0], sizes = [8, 128], strides = [1, 1]} : vector<8x256xf32> to vector<8x128xf32>
    %20 = vector.extract_strided_slice %9 {offsets = [0, 128], sizes = [8, 128], strides = [1, 1]} : vector<8x256xf32> to vector<8x128xf32>
    %21 = arith.addf %19, %20 : vector<8x128xf32>
    %22 = arith.addf %18, %21 : vector<8x128xf32>
    %c0_11 = arith.constant 0 : index
    %c0_12 = arith.constant 0 : index
    %23 = vector.load %arg8[%c0_11, %c0_12] : memref<8x128xf32, #tpu.memory_space<vmem>>, vector<8x128xf32>
    tpu.vector_store %arg8[%c0_11, %c0_12], %22 {strides = array<i32>} : memref<8x128xf32, #tpu.memory_space<vmem>>, vector<8x128xf32>,
    %c0_13 = arith.constant 0 : index
    %c0_14 = arith.constant 0 : index
    %24 = vector.load %arg9[%c0_13, %c0_14] : memref<8x128xf32, #tpu.memory_space<vmem>>, vector<8x128xf32>
    %25 = vector.extract_strided_slice %7 {offsets = [0, 0], sizes = [8, 128], strides = [1, 1]} : vector<8x256xf32> to vector<8x128xf32>
    %26 = vector.extract_strided_slice %7 {offsets = [0, 128], sizes = [8, 128], strides = [1, 1]} : vector<8x256xf32> to vector<8x128xf32>
    %27 = arith.addf %25, %26 : vector<8x128xf32>
    %28 = arith.addf %24, %27 : vector<8x128xf32>
    %c0_15 = arith.constant 0 : index
    %c0_16 = arith.constant 0 : index
    %29 = vector.load %arg9[%c0_15, %c0_16] : memref<8x128xf32, #tpu.memory_space<vmem>>, vector<8x128xf32>
    tpu.vector_store %arg9[%c0_15, %c0_16], %28 {strides = array<i32>} : memref<8x128xf32, #tpu.memory_space<vmem>>, vector<8x128xf32>,
    %c0_i32_17 = arith.constant 0 : i32
    %30 = arith.cmpi eq, %arg1, %c0_i32_17 : i32
    %31 = arith.extui %30 : i1 to i32
    %c0_i32_18 = arith.constant 0 : i32
    %32 = arith.cmpi ne, %31, %c0_i32_18 : i32
    scf.if %32 {
      %c0_19 = arith.constant 0 : index
      %c0_20 = arith.constant 0 : index
      %33 = vector.load %arg7[%c0_19, %c0_20] : memref<8x128xf32, #tpu.memory_space<vmem>>, vector<8x128xf32>
      %cst_21 = arith.constant dense<0.000000e+00> : vector<8xf32>
      %34 = vector.multi_reduction <add>, %33, %cst_21 [1] : vector<8x128xf32> to vector<8xf32>
      %35 = vector.shape_cast %34 : vector<8xf32> to vector<8x1xf32>
      %c0_22 = arith.constant 0 : index
      %c0_23 = arith.constant 0 : index
      %36 = vector.load %arg4[%c0_22, %c0_23] : memref<8x1xf32, #tpu.memory_space<vmem>>, vector<8x1xf32>
      tpu.vector_store %arg4[%c0_22, %c0_23], %35 {strides = array<i32>} : memref<8x1xf32, #tpu.memory_space<vmem>>, vector<8x1xf32>,
      %c0_24 = arith.constant 0 : index
      %c0_25 = arith.constant 0 : index
      %37 = vector.load %arg8[%c0_24, %c0_25] : memref<8x128xf32, #tpu.memory_space<vmem>>, vector<8x128xf32>
      %cst_26 = arith.constant dense<0.000000e+00> : vector<8xf32>
      %38 = vector.multi_reduction <add>, %37, %cst_26 [1] : vector<8x128xf32> to vector<8xf32>
      %39 = vector.shape_cast %38 : vector<8xf32> to vector<8x1xf32>
      %c0_27 = arith.constant 0 : index
      %c0_28 = arith.constant 0 : index
      %40 = vector.load %arg5[%c0_27, %c0_28] : memref<8x1xf32, #tpu.memory_space<vmem>>, vector<8x1xf32>
      tpu.vector_store %arg5[%c0_27, %c0_28], %39 {strides = array<i32>} : memref<8x1xf32, #tpu.memory_space<vmem>>, vector<8x1xf32>,
      %c0_29 = arith.constant 0 : index
      %c0_30 = arith.constant 0 : index
      %41 = vector.load %arg9[%c0_29, %c0_30] : memref<8x128xf32, #tpu.memory_space<vmem>>, vector<8x128xf32>
      %cst_31 = arith.constant dense<0.000000e+00> : vector<8xf32>
      %42 = vector.multi_reduction <add>, %41, %cst_31 [1] : vector<8x128xf32> to vector<8xf32>
      %43 = vector.shape_cast %42 : vector<8xf32> to vector<8x1xf32>
      %c0_32 = arith.constant 0 : index
      %c0_33 = arith.constant 0 : index
      %44 = vector.load %arg6[%c0_32, %c0_33] : memref<8x1xf32, #tpu.memory_space<vmem>>, vector<8x1xf32>
      tpu.vector_store %arg6[%c0_32, %c0_33], %43 {strides = array<i32>} : memref<8x1xf32, #tpu.memory_space<vmem>>, vector<8x1xf32>,
    } else {
    }
    return
  }
  func.func @transform_0(%arg0: i32, %arg1: i32) -> (i32, i32) {
    %c0_i32 = arith.constant 0 : i32
    return %arg0, %arg1 : i32, i32
  }
  func.func @transform_1(%arg0: i32, %arg1: i32) -> (i32, i32) {
    %c0_i32 = arith.constant 0 : i32
    return %arg0, %arg1 : i32, i32
  }
  func.func @transform_2(%arg0: i32, %arg1: i32) -> (i32, i32) {
    %c0_i32 = arith.constant 0 : i32
    %c0_i32_0 = arith.constant 0 : i32
    return %arg0, %c0_i32 : i32, i32
  }
  func.func @transform_3(%arg0: i32, %arg1: i32) -> (i32, i32) {
    %c0_i32 = arith.constant 0 : i32
    %c0_i32_0 = arith.constant 0 : i32
    return %arg0, %c0_i32 : i32, i32
  }
  func.func @transform_4(%arg0: i32, %arg1: i32) -> (i32, i32) {
    %c0_i32 = arith.constant 0 : i32
    %c0_i32_0 = arith.constant 0 : i32
    return %arg0, %c0_i32 : i32, i32
  }
}

</mosaic_0001>

<llo_original>
// kernel: tpu_custom_call.1
$region0: #{tpu_custom_call.1}
  #allocation0 [shape = 'u32[]', space=smem, size = 0x4, offset = 0x4, fixed_abs, tag = 'smem constant byte address 0x4 - core index']
  #allocation1 [shape = 'u32[72,128]{1,0:T(1,128)}', space=vmem, size = 0x9000, scoped, tag = 'internal scratch']
  #allocation2 [shape = 'f32[8,128]{1,0:T(8,128)}', space=vmem, size = 0x1000, scoped, tag = 'scratch operand']
  #allocation3 [shape = 'f32[8,128]{1,0:T(8,128)}', space=vmem, size = 0x1000, scoped, tag = 'scratch operand']
  #allocation4 [shape = 'f32[8,128]{1,0:T(8,128)}', space=vmem, size = 0x1000, scoped, tag = 'scratch operand']
  %s0 = inlined_call_operand.hbm [shape: f32[8,256], index: 0, kind: input, shape index: {}]
  %s1 = inlined_call_operand.hbm [shape: s8[8,256], index: 1, kind: input, shape index: {}]
  %s2 = inlined_call_operand.vmem [shape: f32[8,1], index: 2, kind: output, shape index: {0}]
  %s3 = inlined_call_operand.vmem [shape: f32[8,1], index: 3, kind: output, shape index: {1}]
  %s4 = inlined_call_operand.vmem [shape: f32[8,1], index: 4, kind: output, shape index: {2}]
  %5 = xla_tuple %s2, %s3, %s4
  %s6 = sld [smem:[#allocation0]]
  $region50: #{tpu_custom_call.1} parent=0
    _
  %s8 = ssub.s32 1, %s6
  %s9 = scalar_select 0, %s8, %s6
  $region1: #{tpu_custom_call.1} parent=0
    #allocation5 [shape = 'u8[8192]{0}', space=vmem, size = 0x2000, scoped, tag = 'input window, operand 0, single buffered']
    #allocation6 [shape = 's32[1]{0}', space=sflag, size = 0x4, scoped, tag = 'scoped memory for tpu_custom_call.1']
    #allocation7 [shape = 'u8[2048]{0}', space=vmem, size = 0x800, scoped, tag = 'input window, operand 1, single buffered']
    #allocation8 [shape = 's32[1]{0}', space=sflag, size = 0x4, scoped, tag = 'scoped memory for tpu_custom_call.1']
    %10 = vsyncpa [#allocation6], 0
    %11 = vsyncpa [#allocation8], 0
    // Predicated region
    $region2: #{tpu_custom_call.1} parent=1 // pred_check
      _
    $region3: #{tpu_custom_call.1} parent=1 // pred_check_branch
      %13 = sbr.rel (0) target = $region5
    $region4: #{tpu_custom_call.1} parent=1 // pred_region
      %15 = vsyncadd [#allocation6], 0
      %s17 = sshll.u32 %s0, 4
      %s18 = int_to_ptr.hbm [resolvable:$true] %s17
      %s19 = sshll.u32 [#allocation5], 4
      %s20 = int_to_ptr.vmem [resolvable:$true] %s19
      %22 = dma.hbm_to_vmem [thread:$0]  %s18, 256, %s20, [#allocation6]
    $region5: #{tpu_custom_call.1} parent=1 // pred_fallthru
      _
    // Predicated region
    $region6: #{tpu_custom_call.1} parent=1 // pred_check
      _
    $region7: #{tpu_custom_call.1} parent=1 // pred_check_branch
      %24 = sbr.rel (0) target = $region9
    $region8: #{tpu_custom_call.1} parent=1 // pred_region
      %26 = vsyncadd [#allocation8], 0
      %s28 = sshll.u32 %s1, 4
      %s29 = int_to_ptr.hbm [resolvable:$true] %s28
      %s30 = sshll.u32 [#allocation7], 4
      %s31 = int_to_ptr.vmem [resolvable:$true] %s30
      %33 = dma.hbm_to_vmem [thread:$0]  %s29, 64, %s31, [#allocation8]
    $region9: #{tpu_custom_call.1} parent=1 // pred_fallthru
      _
    // Predicated region
    $region10: #{tpu_custom_call.1} parent=1 // pred_check
      _
    $region11: #{tpu_custom_call.1} parent=1 // pred_check_branch
      %35 = sbr.rel (0) target = $region13
    $region12: #{tpu_custom_call.1} parent=1 // pred_region
      %37 = dma.done [#allocation6], 256
    $region13: #{tpu_custom_call.1} parent=1 // pred_fallthru
      _
    // Predicated region
    $region14: #{tpu_custom_call.1} parent=1 // pred_check
      _
    $region15: #{tpu_custom_call.1} parent=1 // pred_check_branch
      %39 = sbr.rel (0) target = $region17
    $region16: #{tpu_custom_call.1} parent=1 // pred_region
      %41 = dma.done [#allocation8], 64
    $region17: #{tpu_custom_call.1} parent=1 // pred_fallthru
      _
    %p42 = scmp.eq.s32.totalorder 0, 0
    // Predicated region
    $region18: #{tpu_custom_call.1} parent=1 // pred_check
      %p43 = pneg %p42
    $region19: #{tpu_custom_call.1} parent=1 // pred_check_branch
      %45 = sbr.rel (%p43) target = $region21
    $region20: #{tpu_custom_call.1} parent=1 // pred_region
      %46 = vst [vmem:[#allocation2] sm:$0xff] 0.0
      %47 = vst [vmem:[#allocation3] sm:$0xff] 0.0
      %48 = vst [vmem:[#allocation4] sm:$0xff] 0.0
    $region21: #{tpu_custom_call.1} parent=1 // pred_fallthru
      _
    %v49 = vld [vmem:[#allocation5] sm:$0xff]
    %v50 = vld [vmem:[#allocation5 + $0x8] sm:$0xff]
    %vm51 = vcmp.gt.f32.partialorder %v49, 0.0
    %vm52 = vcmp.gt.f32.partialorder %v50, 0.0
    %v53 = vld [vmem:[#allocation7] sm:$0xf]
    %v54 = vunpack.c.0.s8 %v53
    %v55 = vunpack.c.1.s8 %v53
    %v56 = vcvt.s32.f32 %v54
    %v57 = vcvt.s32.f32 %v55
    %v58 = vsel %vm51, 1, 0
    %v59 = vsel %vm52, 1, 0
    %v60 = vcvt.s32.f32 %v58
    %v61 = vcvt.s32.f32 %v59
    %v62 = vsel %vm51, %v56, 0.0
    %v63 = vsel %vm52, %v57, 0.0
    %v64 = vld [vmem:[#allocation2] sm:$0xff]
    %v65 = vadd.f32 %v62, %v63
    %v66 = vadd.f32 %v64, %v65
    %67 = vst [vmem:[#allocation2] sm:$0xff] %v66
    %v68 = vld [vmem:[#allocation3] sm:$0xff]
    %v69 = vadd.f32 %v60, %v61
    %v70 = vadd.f32 %v68, %v69
    %71 = vst [vmem:[#allocation3] sm:$0xff] %v70
    %v72 = vld [vmem:[#allocation4] sm:$0xff]
    %v73 = vadd.f32 %v56, %v57
    %v74 = vadd.f32 %v72, %v73
    %75 = vst [vmem:[#allocation4] sm:$0xff] %v74
    // Predicated region
    $region22: #{tpu_custom_call.1} parent=1 // pred_check
      %p76 = pneg %p42
    $region23: #{tpu_custom_call.1} parent=1 // pred_check_branch
      %78 = sbr.rel (%p76) target = $region25
    $region24: #{tpu_custom_call.1} parent=1 // pred_region
      %v79 = vld [vmem:[#allocation2] sm:$0xff]
      %80 = vadd.xlane.f32.xlu0 %v79
      %v81 = vpop.xlane.xlu0 %80
      %vm82 = vcmask 7168
      %83 = vst.msk [vmem:[%s2] sm:$0xff] %vm82, %v81
      %v84 = vld [vmem:[#allocation3] sm:$0xff]
      %85 = vadd.xlane.f32.xlu0 %v84
      %v86 = vpop.xlane.xlu0 %85
      %87 = vst.msk [vmem:[%s3] sm:$0xff] %vm82, %v86
      %v88 = vld [vmem:[#allocation4] sm:$0xff]
      %89 = vadd.xlane.f32.xlu0 %v88
      %v90 = vpop.xlane.xlu0 %89
      %91 = vst.msk [vmem:[%s4] sm:$0xff] %vm82, %v90
    $region25: #{tpu_custom_call.1} parent=1 // pred_fallthru
      _
    // Predicated region
    $region26: #{tpu_custom_call.1} parent=1 // pred_check
      _
    $region27: #{tpu_custom_call.1} parent=1 // pred_check_branch
      %93 = sbr.rel (0) target = $region29
    $region28: #{tpu_custom_call.1} parent=1 // pred_region
      _
    $region29: #{tpu_custom_call.1} parent=1 // pred_fallthru
      _
    // Predicated region
    $region30: #{tpu_custom_call.1} parent=1 // pred_check
      _
    $region31: #{tpu_custom_call.1} parent=1 // pred_check_branch
      %95 = sbr.rel (0) target = $region33
    $region32: #{tpu_custom_call.1} parent=1 // pred_region
      _
    $region33: #{tpu_custom_call.1} parent=1 // pred_fallthru
      _
    // Predicated region
    $region34: #{tpu_custom_call.1} parent=1 // pred_check
      _
    $region35: #{tpu_custom_call.1} parent=1 // pred_check_branch
      %97 = sbr.rel (0) target = $region37
    $region36: #{tpu_custom_call.1} parent=1 // pred_region
      _
    $region37: #{tpu_custom_call.1} parent=1 // pred_fallthru
      _
    // Predicated region
    $region38: #{tpu_custom_call.1} parent=1 // pred_check
      _
    $region39: #{tpu_custom_call.1} parent=1 // pred_check_branch
      %99 = sbr.rel (0) target = $region41
    $region40: #{tpu_custom_call.1} parent=1 // pred_region
      _
    $region41: #{tpu_custom_call.1} parent=1 // pred_fallthru
      _
    // Predicated region
    $region42: #{tpu_custom_call.1} parent=1 // pred_check
      _
    $region43: #{tpu_custom_call.1} parent=1 // pred_check_branch
      %101 = sbr.rel (0) target = $region45
    $region44: #{tpu_custom_call.1} parent=1 // pred_region
      _
    $region45: #{tpu_custom_call.1} parent=1 // pred_fallthru
      _
    // Predicated region
    $region46: #{tpu_custom_call.1} parent=1 // pred_check
      _
    $region47: #{tpu_custom_call.1} parent=1 // pred_check_branch
      %103 = sbr.rel (0) target = $region49
    $region48: #{tpu_custom_call.1} parent=1 // pred_region
      _
    $region49: #{tpu_custom_call.1} parent=1 // pred_fallthru
      _
    %104 = vsyncpa [#allocation6], 1
    %105 = vsyncpa [#allocation8], 1

</llo_original>
